<compile_context>
chip_gen: v7x
topology: tpu7x:2x2x1
jax: 0.10.0
libtpu: 0.0.40
codegen_flags: <defaults>
</compile_context>

<pallas_src>
import jax
import jax.numpy as jnp
from jax.experimental import pallas as pl
from jax.experimental.pallas import tpu as pltpu


# ----------------------------------------------------------------------------
# Pallas kernel: fused encoder MLP + mean over context points
# ----------------------------------------------------------------------------
def _make_encoder_kernel(tb, tn, n_valid):
    """tb = batch rows per tile, tn = context points per tile, n_valid = true N."""
    needs_mask = (n_valid % tn) != 0
    inv_n = 1.0 / float(n_valid)

    def kernel(xy_ref, w0_ref, b0_ref, w1_ref, b1_ref,
               w2_ref, b2_ref, w3_ref, b3_ref, out_ref):
        nj = pl.program_id(1)
        last = pl.num_programs(1) - 1

        # Zero the resident (TB,128) accumulator at the start of the
        # reduction over context-point tiles.
        @pl.when(nj == 0)
        def _():
            out_ref[...] = jnp.zeros_like(out_ref)

        # (TB, tn, 2) -> (TB*tn, 2): free leading-dim merge (tn % 8 == 0).
        xy = xy_ref[...].reshape(tb * tn, 2)
        x = xy[:, 0:1]                               # (M, 1)
        y = xy[:, 1:2]

        # Layer 0 (in=2) as a broadcast FMA on the VPU instead of a K=2
        # MXU matmul: h0 = x*w0[0,:] + y*w0[1,:] + b0.
        w0 = w0_ref[...]                             # (2, 128) f32
        h = x * w0[0:1, :] + y * w0[1:2, :] + b0_ref[...]
        h = jnp.maximum(h, 0.0)

        # Layers 1-2: bf16 MXU matmuls with f32 accumulation.
        h = jnp.dot(h.astype(jnp.bfloat16), w1_ref[...],
                    preferred_element_type=jnp.float32) + b1_ref[...]
        h = jnp.maximum(h, 0.0)

        h = jnp.dot(h.astype(jnp.bfloat16), w2_ref[...],
                    preferred_element_type=jnp.float32) + b2_ref[...]
        h = jnp.maximum(h, 0.0)                      # ReLU(h2); layer 3 is folded out

        # Back to (TB, tn, 128) for the per-batch row sum (free reshape).
        h = h.reshape(tb, tn, 128)

        if needs_mask:
            # Padded context rows exist only in the LAST context tile; the
            # masking VPU passes are gated so earlier tiles never pay for them.
            @pl.when(nj == last)
            def _():
                n_idx = jax.lax.broadcasted_iota(jnp.int32, (tb, tn, 128), 1)
                hm = jnp.where(n_idx + nj * tn < n_valid, h, 0.0)
                out_ref[...] += jnp.sum(hm, axis=1)

            @pl.when(nj < last)
            def _():
                out_ref[...] += jnp.sum(h, axis=1)
        else:
            out_ref[...] += jnp.sum(h, axis=1)

        # Finalize: mean folded through the ReLU-free layer 3.
        #   out = (sum_n ReLU(h2) / N) @ W3 + b3
        @pl.when(nj == last)
        def _():
            m = out_ref[...] * jnp.float32(inv_n)    # (TB, 128) f32
            out_ref[...] = jnp.dot(m, w3_ref[...],
                                   preferred_element_type=jnp.float32) + b3_ref[...]

    return kernel


# ----------------------------------------------------------------------------
# Wrapper
# ----------------------------------------------------------------------------
def deterministic_encoder_forward(prep_params, context_x, context_y,
                                  *, tb=8, tn=None):
    """
    prep_params: output of prepare_encoder_params().
    context_x, context_y: (B, N) float32.
    Returns representation: (B, 128) float32 (mean over context points).
    """
    w0, b0, w1b, b1, w2b, b2, w3, b3 = prep_params
    B, N = context_x.shape

    if tn is None:
        # tb * tn rows per grid step; cap the per-step working set so it fits
        # comfortably under the scoped-VMEM default on every TPU generation.
        tn = min(512, ((N + 7) // 8) * 8)
    tn = max(8, ((tn + 7) // 8) * 8)

    n_blocks = -(-N // tn)
    n_pad = n_blocks * tn
    b_blocks = -(-B // tb)
    b_pad = b_blocks * tb

    xy = jnp.stack(
        [context_x.astype(jnp.float32), context_y.astype(jnp.float32)],
        axis=-1)                                     # (B, N, 2)
    if (b_pad != B) or (n_pad != N):
        xy = jnp.pad(xy, ((0, b_pad - B), (0, n_pad - N), (0, 0)))

    kernel = _make_encoder_kernel(tb, tn, N)

    def resident(shape):
        return pl.BlockSpec(shape, lambda bi, nj: (0,) * len(shape))

    out = pl.pallas_call(
        kernel,
        out_shape=jax.ShapeDtypeStruct((b_pad, 128), jnp.float32),
        grid_spec=pltpu.PrefetchScalarGridSpec(
            num_scalar_prefetch=0,
            grid=(b_blocks, n_blocks),
            in_specs=[
                pl.BlockSpec((tb, tn, 2), lambda bi, nj: (bi, nj, 0)),  # xy tile
                resident((2, 128)),   resident((1, 128)),               # w0, b0
                resident((128, 128)), resident((1, 128)),               # w1, b1
                resident((128, 128)), resident((1, 128)),               # w2, b2
                resident((128, 128)), resident((1, 128)),               # w3, b3
            ],
            out_specs=pl.BlockSpec((tb, 128), lambda bi, nj: (bi, 0)),
        ),
        compiler_params=pltpu.CompilerParams(
            dimension_semantics=("parallel", "arbitrary"),
            vmem_limit_bytes=32 * 1024 * 1024),
    )(xy, w0, b0, w1b, b1, w2b, b2, w3, b3)

    return out[:B]                                   # (B, 128)


# ----------------------------------------------------------------------------
# Parameters (nn.Linear-equivalent, stored as (in, out) so x @ W + b matches
# PyTorch's x @ W.T + b).
# ----------------------------------------------------------------------------
def init_encoder_params(key):
    keys = jax.random.split(key, 8)

    def lin(kw, kb, fan_in, fan_out):
        bound = 1.0 / float(fan_in) ** 0.5
        w = jax.random.uniform(kw, (fan_in, fan_out), jnp.float32, -bound, bound)
        b = jax.random.uniform(kb, (1, fan_out), jnp.float32, -bound, bound)
        return w, b

    w0, b0 = lin(keys[0], keys[1], 2, 128)      # linearInput
    w1, b1 = lin(keys[2], keys[3], 128, 128)    # linear1
    w2, b2 = lin(keys[4], keys[5], 128, 128)    # linear2
    w3, b3 = lin(keys[6], keys[7], 128, 128)    # linear3
    return (w0, b0, w1, b1, w2, b2, w3, b3)


def prepare_encoder_params(params):
    """One-time prep: cast the MXU-layer weights to bf16 outside the hot path."""
    w0, b0, w1, b1, w2, b2, w3, b3 = params
    return (w0, b0,
            w1.astype(jnp.bfloat16), b1,
            w2.astype(jnp.bfloat16), b2,
            w3, b3)                                  # w3 stays f32 (finalize matmul)


# ----------------------------------------------------------------------------
# Pure-JAX reference (original per-row layer-3 + mean ordering; mirrors the
# kernel's bf16 layers 1-2 so the tolerance only has to absorb reassociation).
# ----------------------------------------------------------------------------
def _reference_forward(params, context_x, context_y):
    w0, b0, w1, b1, w2, b2, w3, b3 = params
    B, N = context_x.shape
    inp = jnp.stack([context_x, context_y], axis=-1).reshape(B * N, 2)
    bf = lambda a: a.astype(jnp.bfloat16)
    hp = jax.lax.Precision.HIGHEST
    h = jnp.maximum(jnp.dot(inp, w0, precision=hp) + b0, 0.0)
    h = jnp.maximum(jnp.dot(bf(h), bf(w1), preferred_element_type=jnp.float32) + b1, 0.0)
    h = jnp.maximum(jnp.dot(bf(h), bf(w2), preferred_element_type=jnp.float32) + b2, 0.0)
    h = jnp.dot(h, w3, precision=hp) + b3
    return h.reshape(B, N, 128).mean(axis=1)


if __name__ == "__main__":
    key = jax.random.PRNGKey(0)
    kp, kx, ky = jax.random.split(key, 3)

    params = init_encoder_params(kp)
    prep = prepare_encoder_params(params)

    # Case 1: BATCH_SIZE x NUM_OF_OBSERVATIONS = 2 x 16 (no padding needed).
    B, N = 2, 16
    context_x = jax.random.normal(kx, (B, N), dtype=jnp.float32)
    context_y = jax.random.normal(ky, (B, N), dtype=jnp.float32)

    rep = deterministic_encoder_forward(prep, context_x, context_y)
    jax.block_until_ready(rep)
    assert rep.shape == (B, 128)
    rep_ref = _reference_forward(params, context_x, context_y)
    err = float(jnp.max(jnp.abs(rep - rep_ref)))
    assert jnp.allclose(rep, rep_ref, atol=1e-2, rtol=1e-2), f"max abs err {err}"

    # Case 2: exercises batch padding (B=3 -> 8), multi-tile reduction and the
    # gated padded-context-row mask (N=21, tn=16 -> 2 tiles, 5 valid rows last).
    kx2, ky2 = jax.random.split(jax.random.PRNGKey(1))
    B2, N2 = 3, 21
    cx2 = jax.random.normal(kx2, (B2, N2), dtype=jnp.float32)
    cy2 = jax.random.normal(ky2, (B2, N2), dtype=jnp.float32)
    rep2 = deterministic_encoder_forward(prep, cx2, cy2, tn=16)
    jax.block_until_ready(rep2)
    ref2 = _reference_forward(params, cx2, cy2)
    err2 = float(jnp.max(jnp.abs(rep2 - ref2)))
    assert jnp.allclose(rep2, ref2, atol=1e-2, rtol=1e-2), f"max abs err {err2}"

    print("KERNEL_OK")
</pallas_src>

<mosaic_0001>
module attributes {stable_mosaic.version = 11 : i64} {
  func.func @kernel(%arg0: i32, %arg1: i32, %arg2: memref<8x16x2xf32, #tpu.memory_space<vmem>>, %arg3: memref<2x128xf32, #tpu.memory_space<vmem>>, %arg4: memref<1x128xf32, #tpu.memory_space<vmem>>, %arg5: memref<128x128xbf16, #tpu.memory_space<vmem>>, %arg6: memref<1x128xf32, #tpu.memory_space<vmem>>, %arg7: memref<128x128xbf16, #tpu.memory_space<vmem>>, %arg8: memref<1x128xf32, #tpu.memory_space<vmem>>, %arg9: memref<128x128xf32, #tpu.memory_space<vmem>>, %arg10: memref<1x128xf32, #tpu.memory_space<vmem>>, %arg11: memref<8x128xf32, #tpu.memory_space<vmem>>) attributes {dimension_semantics = [#tpu.dimension_semantics<parallel>, #tpu.dimension_semantics<arbitrary>], iteration_bounds = array<i64: 1, 1>, scalar_prefetch = 0 : i64, scratch_operands = 0 : i64, tpu.core_type = #tpu.core_type<tc>, window_params = [{transform_indices = @transform_0, window_bounds = array<i64: 8, 16, 2>}, {pipeline_mode = #tpu.pipeline_mode<synchronous>, transform_indices = @transform_1, window_bounds = array<i64: 2, 128>}, {pipeline_mode = #tpu.pipeline_mode<synchronous>, transform_indices = @transform_2, window_bounds = array<i64: 1, 128>}, {pipeline_mode = #tpu.pipeline_mode<synchronous>, transform_indices = @transform_3, window_bounds = array<i64: 128, 128>}, {pipeline_mode = #tpu.pipeline_mode<synchronous>, transform_indices = @transform_4, window_bounds = array<i64: 1, 128>}, {pipeline_mode = #tpu.pipeline_mode<synchronous>, transform_indices = @transform_5, window_bounds = array<i64: 128, 128>}, {pipeline_mode = #tpu.pipeline_mode<synchronous>, transform_indices = @transform_6, window_bounds = array<i64: 1, 128>}, {pipeline_mode = #tpu.pipeline_mode<synchronous>, transform_indices = @transform_7, window_bounds = array<i64: 128, 128>}, {pipeline_mode = #tpu.pipeline_mode<synchronous>, transform_indices = @transform_8, window_bounds = array<i64: 1, 128>}, {transform_indices = @transform_9, window_bounds = array<i64: 8, 128>}]} {
    %c0_i32 = arith.constant 0 : i32
    %0 = arith.cmpi eq, %arg1, %c0_i32 : i32
    %1 = arith.extui %0 : i1 to i32
    %c0_i32_0 = arith.constant 0 : i32
    %2 = arith.cmpi ne, %1, %c0_i32_0 : i32
    scf.if %2 {
      %cst_26 = arith.constant 0.000000e+00 : f32
      %46 = vector.broadcast %cst_26 : f32 to vector<8x128xf32>
      %c0_27 = arith.constant 0 : index
      %c0_28 = arith.constant 0 : index
      %47 = vector.load %arg11[%c0_27, %c0_28] : memref<8x128xf32, #tpu.memory_space<vmem>>, vector<8x128xf32>
      tpu.vector_store %arg11[%c0_27, %c0_28], %46 {strides = array<i32>} : memref<8x128xf32, #tpu.memory_space<vmem>>, vector<8x128xf32>,
    } else {
    }
    %c0 = arith.constant 0 : index
    %c0_1 = arith.constant 0 : index
    %c0_2 = arith.constant 0 : index
    %3 = vector.load %arg2[%c0, %c0_1, %c0_2] : memref<8x16x2xf32, #tpu.memory_space<vmem>>, vector<8x16x2xf32>
    %4 = vector.shape_cast %3 : vector<8x16x2xf32> to vector<128x2xf32>
    %5 = vector.extract_strided_slice %4 {offsets = [0, 0], sizes = [128, 1], strides = [1, 1]} : vector<128x2xf32> to vector<128x1xf32>
    %6 = vector.extract_strided_slice %4 {offsets = [0, 1], sizes = [128, 1], strides = [1, 1]} : vector<128x2xf32> to vector<128x1xf32>
    %c0_3 = arith.constant 0 : index
    %c0_4 = arith.constant 0 : index
    %7 = vector.load %arg3[%c0_3, %c0_4] : memref<2x128xf32, #tpu.memory_space<vmem>>, vector<2x128xf32>
    %8 = vector.extract_strided_slice %7 {offsets = [0, 0], sizes = [1, 128], strides = [1, 1]} : vector<2x128xf32> to vector<1x128xf32>
    %9 = vector.broadcast %5 : vector<128x1xf32> to vector<128x128xf32>
    %10 = vector.broadcast %8 : vector<1x128xf32> to vector<128x128xf32>
    %11 = arith.mulf %9, %10 : vector<128x128xf32>
    %12 = vector.extract_strided_slice %7 {offsets = [1, 0], sizes = [1, 128], strides = [1, 1]} : vector<2x128xf32> to vector<1x128xf32>
    %13 = vector.broadcast %6 : vector<128x1xf32> to vector<128x128xf32>
    %14 = vector.broadcast %12 : vector<1x128xf32> to vector<128x128xf32>
    %15 = arith.mulf %13, %14 : vector<128x128xf32>
    %16 = arith.addf %11, %15 : vector<128x128xf32>
    %c0_5 = arith.constant 0 : index
    %c0_6 = arith.constant 0 : index
    %17 = vector.load %arg4[%c0_5, %c0_6] : memref<1x128xf32, #tpu.memory_space<vmem>>, vector<1x128xf32>
    %18 = vector.broadcast %17 : vector<1x128xf32> to vector<128x128xf32>
    %19 = arith.addf %16, %18 : vector<128x128xf32>
    %cst = arith.constant 0.000000e+00 : f32
    %20 = vector.broadcast %cst : f32 to vector<128x128xf32>
    %21 = arith.maximumf %19, %20 : vector<128x128xf32>
    %22 = arith.truncf %21 : vector<128x128xf32> to vector<128x128xbf16>
    %c0_7 = arith.constant 0 : index
    %c0_8 = arith.constant 0 : index
    %23 = vector.load %arg5[%c0_7, %c0_8] : memref<128x128xbf16, #tpu.memory_space<vmem>>, vector<128x128xbf16>
    %cst_9 = arith.constant dense<0.000000e+00> : vector<128x128xf32>
    %24 = tpu.matmul %22, %23, %cst_9 {dimension_numbers = #tpu.dot_dimension_numbers<[1], [0], [0], [1], [0, 0, 1, 1], [], []>} : vector<128x128xbf16>, vector<128x128xbf16>, vector<128x128xf32> -> vector<128x128xf32>
    %c0_10 = arith.constant 0 : index
    %c0_11 = arith.constant 0 : index
    %25 = vector.load %arg6[%c0_10, %c0_11] : memref<1x128xf32, #tpu.memory_space<vmem>>, vector<1x128xf32>
    %26 = vector.broadcast %25 : vector<1x128xf32> to vector<128x128xf32>
    %27 = arith.addf %24, %26 : vector<128x128xf32>
    %cst_12 = arith.constant 0.000000e+00 : f32
    %28 = vector.broadcast %cst_12 : f32 to vector<128x128xf32>
    %29 = arith.maximumf %27, %28 : vector<128x128xf32>
    %30 = arith.truncf %29 : vector<128x128xf32> to vector<128x128xbf16>
    %c0_13 = arith.constant 0 : index
    %c0_14 = arith.constant 0 : index
    %31 = vector.load %arg7[%c0_13, %c0_14] : memref<128x128xbf16, #tpu.memory_space<vmem>>, vector<128x128xbf16>
    %cst_15 = arith.constant dense<0.000000e+00> : vector<128x128xf32>
    %32 = tpu.matmul %30, %31, %cst_15 {dimension_numbers = #tpu.dot_dimension_numbers<[1], [0], [0], [1], [0, 0, 1, 1], [], []>} : vector<128x128xbf16>, vector<128x128xbf16>, vector<128x128xf32> -> vector<128x128xf32>
    %c0_16 = arith.constant 0 : index
    %c0_17 = arith.constant 0 : index
    %33 = vector.load %arg8[%c0_16, %c0_17] : memref<1x128xf32, #tpu.memory_space<vmem>>, vector<1x128xf32>
    %34 = vector.broadcast %33 : vector<1x128xf32> to vector<128x128xf32>
    %35 = arith.addf %32, %34 : vector<128x128xf32>
    %cst_18 = arith.constant 0.000000e+00 : f32
    %36 = vector.broadcast %cst_18 : f32 to vector<128x128xf32>
    %37 = arith.maximumf %35, %36 : vector<128x128xf32>
    %38 = vector.shape_cast %37 : vector<128x128xf32> to vector<8x16x128xf32>
    %c0_19 = arith.constant 0 : index
    %c0_20 = arith.constant 0 : index
    %39 = vector.load %arg11[%c0_19, %c0_20] : memref<8x128xf32, #tpu.memory_space<vmem>>, vector<8x128xf32>
    %cst_21 = arith.constant dense<0.000000e+00> : vector<8x128xf32>
    %40 = vector.multi_reduction <add>, %38, %cst_21 [1] : vector<8x16x128xf32> to vector<8x128xf32>
    %41 = arith.addf %39, %40 : vector<8x128xf32>
    %c0_22 = arith.constant 0 : index
    %c0_23 = arith.constant 0 : index
    %42 = vector.load %arg11[%c0_22, %c0_23] : memref<8x128xf32, #tpu.memory_space<vmem>>, vector<8x128xf32>
    tpu.vector_store %arg11[%c0_22, %c0_23], %41 {strides = array<i32>} : memref<8x128xf32, #tpu.memory_space<vmem>>, vector<8x128xf32>,
    %c0_i32_24 = arith.constant 0 : i32
    %43 = arith.cmpi eq, %arg1, %c0_i32_24 : i32
    %44 = arith.extui %43 : i1 to i32
    %c0_i32_25 = arith.constant 0 : i32
    %45 = arith.cmpi ne, %44, %c0_i32_25 : i32
    scf.if %45 {
      %c0_26 = arith.constant 0 : index
      %c0_27 = arith.constant 0 : index
      %46 = vector.load %arg11[%c0_26, %c0_27] : memref<8x128xf32, #tpu.memory_space<vmem>>, vector<8x128xf32>
      %cst_28 = arith.constant 6.250000e-02 : f32
      %47 = vector.broadcast %cst_28 : f32 to vector<8x128xf32>
      %48 = arith.mulf %46, %47 : vector<8x128xf32>
      %c0_29 = arith.constant 0 : index
      %c0_30 = arith.constant 0 : index
      %49 = vector.load %arg9[%c0_29, %c0_30] : memref<128x128xf32, #tpu.memory_space<vmem>>, vector<128x128xf32>
      %cst_31 = arith.constant dense<0.000000e+00> : vector<8x128xf32>
      %50 = tpu.matmul %48, %49, %cst_31 {dimension_numbers = #tpu.dot_dimension_numbers<[1], [0], [0], [1], [0, 0, 1, 1], [], []>} : vector<8x128xf32>, vector<128x128xf32>, vector<8x128xf32> -> vector<8x128xf32>
      %c0_32 = arith.constant 0 : index
      %c0_33 = arith.constant 0 : index
      %51 = vector.load %arg10[%c0_32, %c0_33] : memref<1x128xf32, #tpu.memory_space<vmem>>, vector<1x128xf32>
      %52 = vector.broadcast %51 : vector<1x128xf32> to vector<8x128xf32>
      %53 = arith.addf %50, %52 : vector<8x128xf32>
      %c0_34 = arith.constant 0 : index
      %c0_35 = arith.constant 0 : index
      %54 = vector.load %arg11[%c0_34, %c0_35] : memref<8x128xf32, #tpu.memory_space<vmem>>, vector<8x128xf32>
      tpu.vector_store %arg11[%c0_34, %c0_35], %53 {strides = array<i32>} : memref<8x128xf32, #tpu.memory_space<vmem>>, vector<8x128xf32>,
    } else {
    }
    return
  }
  func.func @transform_0(%arg0: i32, %arg1: i32) -> (i32, i32, i32) {
    %c0_i32 = arith.constant 0 : i32
    %c0_i32_0 = arith.constant 0 : i32
    return %arg0, %arg1, %c0_i32 : i32, i32, i32
  }
  func.func @transform_1(%arg0: i32, %arg1: i32) -> (i32, i32) {
    %c0_i32 = arith.constant 0 : i32
    %c0_i32_0 = arith.constant 0 : i32
    %c0_i32_1 = arith.constant 0 : i32
    return %c0_i32, %c0_i32_0 : i32, i32
  }
  func.func @transform_2(%arg0: i32, %arg1: i32) -> (i32, i32) {
    %c0_i32 = arith.constant 0 : i32
    %c0_i32_0 = arith.constant 0 : i32
    %c0_i32_1 = arith.constant 0 : i32
    return %c0_i32, %c0_i32_0 : i32, i32
  }
  func.func @transform_3(%arg0: i32, %arg1: i32) -> (i32, i32) {
    %c0_i32 = arith.constant 0 : i32
    %c0_i32_0 = arith.constant 0 : i32
    %c0_i32_1 = arith.constant 0 : i32
    return %c0_i32, %c0_i32_0 : i32, i32
  }
  func.func @transform_4(%arg0: i32, %arg1: i32) -> (i32, i32) {
    %c0_i32 = arith.constant 0 : i32
    %c0_i32_0 = arith.constant 0 : i32
    %c0_i32_1 = arith.constant 0 : i32
    return %c0_i32, %c0_i32_0 : i32, i32
  }
  func.func @transform_5(%arg0: i32, %arg1: i32) -> (i32, i32) {
    %c0_i32 = arith.constant 0 : i32
    %c0_i32_0 = arith.constant 0 : i32
    %c0_i32_1 = arith.constant 0 : i32
    return %c0_i32, %c0_i32_0 : i32, i32
  }
  func.func @transform_6(%arg0: i32, %arg1: i32) -> (i32, i32) {
    %c0_i32 = arith.constant 0 : i32
    %c0_i32_0 = arith.constant 0 : i32
    %c0_i32_1 = arith.constant 0 : i32
    return %c0_i32, %c0_i32_0 : i32, i32
  }
  func.func @transform_7(%arg0: i32, %arg1: i32) -> (i32, i32) {
    %c0_i32 = arith.constant 0 : i32
    %c0_i32_0 = arith.constant 0 : i32
    %c0_i32_1 = arith.constant 0 : i32
    return %c0_i32, %c0_i32_0 : i32, i32
  }
  func.func @transform_8(%arg0: i32, %arg1: i32) -> (i32, i32) {
    %c0_i32 = arith.constant 0 : i32
    %c0_i32_0 = arith.constant 0 : i32
    %c0_i32_1 = arith.constant 0 : i32
    return %c0_i32, %c0_i32_0 : i32, i32
  }
  func.func @transform_9(%arg0: i32, %arg1: i32) -> (i32, i32) {
    %c0_i32 = arith.constant 0 : i32
    %c0_i32_0 = arith.constant 0 : i32
    return %arg0, %c0_i32 : i32, i32
  }
}

</mosaic_0001>

<llo_original>
// kernel: tpu_custom_call.1
$region0: #{tpu_custom_call.1}
  #allocation0 [shape = 'u32[]', space=smem, size = 0x4, offset = 0x4, fixed_abs, tag = 'smem constant byte address 0x4 - core index']
  #allocation1 [shape = 'u32[144,128]{1,0:T(1,128)}', space=vmem, size = 0x12000, scoped, tag = 'internal scratch']
  %s0 = inlined_call_operand.vmem [shape: f32[8,16,2], index: 0, kind: input, shape index: {}]
  %s1 = inlined_call_operand.vmem [shape: f32[2,128], index: 1, kind: input, shape index: {}]
  %s2 = inlined_call_operand.vmem [shape: f32[1,128], index: 2, kind: input, shape index: {}]
  %s3 = inlined_call_operand.hbm [shape: bf16[128,128], index: 3, kind: input, shape index: {}]
  %s4 = inlined_call_operand.vmem [shape: f32[1,128], index: 4, kind: input, shape index: {}]
  %s5 = inlined_call_operand.hbm [shape: bf16[128,128], index: 5, kind: input, shape index: {}]
  %s6 = inlined_call_operand.vmem [shape: f32[1,128], index: 6, kind: input, shape index: {}]
  %s7 = inlined_call_operand.vmem [shape: f32[128,128], index: 7, kind: input, shape index: {}]
  %s8 = inlined_call_operand.vmem [shape: f32[1,128], index: 8, kind: input, shape index: {}]
  %s9 = inlined_call_operand.hbm [shape: f32[8,128], index: 9, kind: output, shape index: {}]
  %s10 = sld [smem:[#allocation0]]
  $region62: #{tpu_custom_call.1} parent=0
    _
  %s12 = ssub.s32 1, %s10
  %s13 = scalar_select 0, %s12, %s10
  $region1: #{tpu_custom_call.1} parent=0
    #allocation2 [shape = 'u8[32768]{0}', space=vmem, size = 0x8000, scoped, tag = 'input window, operand 3, single buffered']
    #allocation3 [shape = 's32[1]{0}', space=sflag, size = 0x4, scoped, tag = 'scoped memory for tpu_custom_call.1']
    #allocation4 [shape = 's32[1]{0}', space=sflag, size = 0x4, scoped, tag = 'scoped memory for tpu_custom_call.1']
    #allocation5 [shape = 'u8[32768]{0}', space=vmem, size = 0x8000, scoped, tag = 'input window, operand 5, single buffered']
    #allocation6 [shape = 's32[1]{0}', space=sflag, size = 0x4, scoped, tag = 'scoped memory for tpu_custom_call.1']
    #allocation7 [shape = 'u8[4096]{0}', space=vmem, size = 0x1000, scoped, tag = 'output window, operand 0, single buffered']
    %14 = vsyncpa [#allocation3], 0
    %15 = vsyncpa [#allocation6], 0
    %16 = vsyncpa [#allocation4], 0
    // Predicated region
    $region2: #{tpu_custom_call.1} parent=1 // pred_check
      _
    $region3: #{tpu_custom_call.1} parent=1 // pred_check_branch
      %18 = sbr.rel (0) target = $region5
    $region4: #{tpu_custom_call.1} parent=1 // pred_region
      _
    $region5: #{tpu_custom_call.1} parent=1 // pred_fallthru
      _
    // Predicated region
    $region6: #{tpu_custom_call.1} parent=1 // pred_check
      _
    $region7: #{tpu_custom_call.1} parent=1 // pred_check_branch
      %20 = sbr.rel (0) target = $region9
    $region8: #{tpu_custom_call.1} parent=1 // pred_region
      _
    $region9: #{tpu_custom_call.1} parent=1 // pred_fallthru
      _
    // Predicated region
    $region10: #{tpu_custom_call.1} parent=1 // pred_check
      _
    $region11: #{tpu_custom_call.1} parent=1 // pred_check_branch
      %22 = sbr.rel (0) target = $region13
    $region12: #{tpu_custom_call.1} parent=1 // pred_region
      _
    $region13: #{tpu_custom_call.1} parent=1 // pred_fallthru
      _
    // Predicated region
    $region14: #{tpu_custom_call.1} parent=1 // pred_check
      _
    $region15: #{tpu_custom_call.1} parent=1 // pred_check_branch
      %24 = sbr.rel (0) target = $region17
    $region16: #{tpu_custom_call.1} parent=1 // pred_region
      %s26 = ssub.s32 1024, 1024
      %27 = vsyncadd [#allocation3], %s26
      %s28 = sshll.u32 [#allocation2], 4
      %s29 = int_to_ptr.vmem [resolvable:$true] %s28
      %34 = dma.hbm_to_vmem [thread:$0]  %s3, 1024, %s29, [#allocation3], 64, 64, 4
    $region17: #{tpu_custom_call.1} parent=1 // pred_fallthru
      _
    // Predicated region
    $region18: #{tpu_custom_call.1} parent=1 // pred_check
      _
    $region19: #{tpu_custom_call.1} parent=1 // pred_check_branch
      %36 = sbr.rel (0) target = $region21
    $region20: #{tpu_custom_call.1} parent=1 // pred_region
      _
    $region21: #{tpu_custom_call.1} parent=1 // pred_fallthru
      _
    // Predicated region
    $region22: #{tpu_custom_call.1} parent=1 // pred_check
      _
    $region23: #{tpu_custom_call.1} parent=1 // pred_check_branch
      %38 = sbr.rel (0) target = $region25
    $region24: #{tpu_custom_call.1} parent=1 // pred_region
      %s40 = ssub.s32 1024, 1024
      %41 = vsyncadd [#allocation6], %s40
      %s42 = sshll.u32 [#allocation5], 4
      %s43 = int_to_ptr.vmem [resolvable:$true] %s42
      %48 = dma.hbm_to_vmem [thread:$0]  %s5, 1024, %s43, [#allocation6], 64, 64, 4
    $region25: #{tpu_custom_call.1} parent=1 // pred_fallthru
      _
    // Predicated region
    $region26: #{tpu_custom_call.1} parent=1 // pred_check
      _
    $region27: #{tpu_custom_call.1} parent=1 // pred_check_branch
      %50 = sbr.rel (0) target = $region29
    $region28: #{tpu_custom_call.1} parent=1 // pred_region
      _
    $region29: #{tpu_custom_call.1} parent=1 // pred_fallthru
      _
    // Predicated region
    $region30: #{tpu_custom_call.1} parent=1 // pred_check
      _
    $region31: #{tpu_custom_call.1} parent=1 // pred_check_branch
      %52 = sbr.rel (0) target = $region33
    $region32: #{tpu_custom_call.1} parent=1 // pred_region
      _
    $region33: #{tpu_custom_call.1} parent=1 // pred_fallthru
      _
    // Predicated region
    $region34: #{tpu_custom_call.1} parent=1 // pred_check
      _
    $region35: #{tpu_custom_call.1} parent=1 // pred_check_branch
      %54 = sbr.rel (0) target = $region37
    $region36: #{tpu_custom_call.1} parent=1 // pred_region
      _
    $region37: #{tpu_custom_call.1} parent=1 // pred_fallthru
      _
    // Predicated region
    $region38: #{tpu_custom_call.1} parent=1 // pred_check
      _
    $region39: #{tpu_custom_call.1} parent=1 // pred_check_branch
      %56 = sbr.rel (0) target = $region41
    $region40: #{tpu_custom_call.1} parent=1 // pred_region
      %57 = dma.done [#allocation3], 1024
    $region41: #{tpu_custom_call.1} parent=1 // pred_fallthru
      _
    // Predicated region
    $region42: #{tpu_custom_call.1} parent=1 // pred_check
      _
    $region43: #{tpu_custom_call.1} parent=1 // pred_check_branch
      %59 = sbr.rel (0) target = $region45
    $region44: #{tpu_custom_call.1} parent=1 // pred_region
      %60 = dma.done [#allocation6], 1024
    $region45: #{tpu_custom_call.1} parent=1 // pred_fallthru
      _
    %p62 = scmp.eq.s32.totalorder 0, 0
    // Predicated region
    $region46: #{tpu_custom_call.1} parent=1 // pred_check
      %p63 = pneg %p62
    $region47: #{tpu_custom_call.1} parent=1 // pred_check_branch
      %65 = sbr.rel (%p63) target = $region49
    $region48: #{tpu_custom_call.1} parent=1 // pred_region
      %66 = vst [vmem:[#allocation7] sm:$0xff] 0.0
    $region49: #{tpu_custom_call.1} parent=1 // pred_fallthru
      _
    %v67 = vld [vmem:[%s0] sm:$0xff]
    %v68 = vld [vmem:[%s0 + $0x8] sm:$0xff]
    %v69 = vld [vmem:[%s0 + $0x10] sm:$0xff]
    %v70 = vld [vmem:[%s0 + $0x18] sm:$0xff]
    %v71 = vld [vmem:[%s0 + $0x20] sm:$0xff]
    %v72 = vld [vmem:[%s0 + $0x28] sm:$0xff]
    %v73 = vld [vmem:[%s0 + $0x30] sm:$0xff]
    %v74 = vld [vmem:[%s0 + $0x38] sm:$0xff]
    %v75 = vld [vmem:[%s0 + $0x40] sm:$0xff]
    %v76 = vld [vmem:[%s0 + $0x48] sm:$0xff]
    %v77 = vld [vmem:[%s0 + $0x50] sm:$0xff]
    %v78 = vld [vmem:[%s0 + $0x58] sm:$0xff]
    %v79 = vld [vmem:[%s0 + $0x60] sm:$0xff]
    %v80 = vld [vmem:[%s0 + $0x68] sm:$0xff]
    %v81 = vld [vmem:[%s0 + $0x70] sm:$0xff]
    %v82 = vld [vmem:[%s0 + $0x78] sm:$0xff]
    %v83 = vld [vmem:[%s1] sm:$0x3]
    %85 = vset.pattern.permute.xlu0 0
    %86 = vperm.xlu0 %85, %v67
    %v87 = vpop.permute.xlu0 %86
    %90 = vset.pattern.permute.xlu0 0
    %91 = vperm.xlu0 %90, %v68
    %v92 = vpop.permute.xlu0 %91
    %95 = vset.pattern.permute.xlu0 0
    %96 = vperm.xlu0 %95, %v69
    %v97 = vpop.permute.xlu0 %96
    %100 = vset.pattern.permute.xlu0 0
    %101 = vperm.xlu0 %100, %v70
    %v102 = vpop.permute.xlu0 %101
    %105 = vset.pattern.permute.xlu0 0
    %106 = vperm.xlu0 %105, %v71
    %v107 = vpop.permute.xlu0 %106
    %110 = vset.pattern.permute.xlu0 0
    %111 = vperm.xlu0 %110, %v72
    %v112 = vpop.permute.xlu0 %111
    %115 = vset.pattern.permute.xlu0 0
    %116 = vperm.xlu0 %115, %v73
    %v117 = vpop.permute.xlu0 %116
    %120 = vset.pattern.permute.xlu0 0
    %121 = vperm.xlu0 %120, %v74
    %v122 = vpop.permute.xlu0 %121
    %125 = vset.pattern.permute.xlu0 0
    %126 = vperm.xlu0 %125, %v75
    %v127 = vpop.permute.xlu0 %126
    %130 = vset.pattern.permute.xlu0 0
    %131 = vperm.xlu0 %130, %v76
    %v132 = vpop.permute.xlu0 %131
    %135 = vset.pattern.permute.xlu0 0
    %136 = vperm.xlu0 %135, %v77
    %v137 = vpop.permute.xlu0 %136
    %140 = vset.pattern.permute.xlu0 0
    %141 = vperm.xlu0 %140, %v78
    %v142 = vpop.permute.xlu0 %141
    %145 = vset.pattern.permute.xlu0 0
    %146 = vperm.xlu0 %145, %v79
    %v147 = vpop.permute.xlu0 %146
    %150 = vset.pattern.permute.xlu0 0
    %151 = vperm.xlu0 %150, %v80
    %v152 = vpop.permute.xlu0 %151
    %155 = vset.pattern.permute.xlu0 0
    %156 = vperm.xlu0 %155, %v81
    %v157 = vpop.permute.xlu0 %156
    %160 = vset.pattern.permute.xlu0 0
    %161 = vperm.xlu0 %160, %v82
    %v162 = vpop.permute.xlu0 %161
    %v164 = vlaneseq
    %v165 = vshrl.u32 %v164, 7
    %v166 = vsub.s32 0, %v165
    %v167 = vrot.slane %v83, %v166
    %v168 = vmul.f32 %v87, %v167
    %v169 = vmul.f32 %v92, %v167
    %v170 = vmul.f32 %v97, %v167
    %v171 = vmul.f32 %v102, %v167
    %v172 = vmul.f32 %v107, %v167
    %v173 = vmul.f32 %v112, %v167
    %v174 = vmul.f32 %v117, %v167
    %v175 = vmul.f32 %v122, %v167
    %v176 = vmul.f32 %v127, %v167
    %v177 = vmul.f32 %v132, %v167
    %v178 = vmul.f32 %v137, %v167
    %v179 = vmul.f32 %v142, %v167
    %v180 = vmul.f32 %v147, %v167
    %v181 = vmul.f32 %v152, %v167
    %v182 = vmul.f32 %v157, %v167
    %v183 = vmul.f32 %v162, %v167
    %184 = vset.pattern.permute.xlu0 1
    %185 = vperm.xlu0 %184, %v67
    %v186 = vpop.permute.xlu0 %185
    %188 = vset.pattern.permute.xlu0 1
    %189 = vperm.xlu0 %188, %v68
    %v190 = vpop.permute.xlu0 %189
    %192 = vset.pattern.permute.xlu0 1
    %193 = vperm.xlu0 %192, %v69
    %v194 = vpop.permute.xlu0 %193
    %196 = vset.pattern.permute.xlu0 1
    %197 = vperm.xlu0 %196, %v70
    %v198 = vpop.permute.xlu0 %197
    %200 = vset.pattern.permute.xlu0 1
    %201 = vperm.xlu0 %200, %v71
    %v202 = vpop.permute.xlu0 %201
    %204 = vset.pattern.permute.xlu0 1
    %205 = vperm.xlu0 %204, %v72
    %v206 = vpop.permute.xlu0 %205
    %208 = vset.pattern.permute.xlu0 1
    %209 = vperm.xlu0 %208, %v73
    %v210 = vpop.permute.xlu0 %209
    %212 = vset.pattern.permute.xlu0 1
    %213 = vperm.xlu0 %212, %v74
    %v214 = vpop.permute.xlu0 %213
    %216 = vset.pattern.permute.xlu0 1
    %217 = vperm.xlu0 %216, %v75
    %v218 = vpop.permute.xlu0 %217
    %220 = vset.pattern.permute.xlu0 1
    %221 = vperm.xlu0 %220, %v76
    %v222 = vpop.permute.xlu0 %221
    %224 = vset.pattern.permute.xlu0 1
    %225 = vperm.xlu0 %224, %v77
    %v226 = vpop.permute.xlu0 %225
    %228 = vset.pattern.permute.xlu0 1
    %229 = vperm.xlu0 %228, %v78
    %v230 = vpop.permute.xlu0 %229
    %232 = vset.pattern.permute.xlu0 1
    %233 = vperm.xlu0 %232, %v79
    %v234 = vpop.permute.xlu0 %233
    %236 = vset.pattern.permute.xlu0 1
    %237 = vperm.xlu0 %236, %v80
    %v238 = vpop.permute.xlu0 %237
    %240 = vset.pattern.permute.xlu0 1
    %241 = vperm.xlu0 %240, %v81
    %v242 = vpop.permute.xlu0 %241
    %244 = vset.pattern.permute.xlu0 1
    %245 = vperm.xlu0 %244, %v82
    %v246 = vpop.permute.xlu0 %245
    %v248 = vlaneseq
    %v249 = vshrl.u32 %v248, 7
    %v250 = vsub.s32 1, %v249
    %v251 = vrot.slane %v83, %v250
    %v252 = vmul.f32 %v186, %v251
    %v253 = vmul.f32 %v190, %v251
    %v254 = vmul.f32 %v194, %v251
    %v255 = vmul.f32 %v198, %v251
    %v256 = vmul.f32 %v202, %v251
    %v257 = vmul.f32 %v206, %v251
    %v258 = vmul.f32 %v210, %v251
    %v259 = vmul.f32 %v214, %v251
    %v260 = vmul.f32 %v218, %v251
    %v261 = vmul.f32 %v222, %v251
    %v262 = vmul.f32 %v226, %v251
    %v263 = vmul.f32 %v230, %v251
    %v264 = vmul.f32 %v234, %v251
    %v265 = vmul.f32 %v238, %v251
    %v266 = vmul.f32 %v242, %v251
    %v267 = vmul.f32 %v246, %v251
    %v268 = vadd.f32 %v168, %v252
    %v269 = vadd.f32 %v169, %v253
    %v270 = vadd.f32 %v170, %v254
    %v271 = vadd.f32 %v171, %v255
    %v272 = vadd.f32 %v172, %v256
    %v273 = vadd.f32 %v173, %v257
    %v274 = vadd.f32 %v174, %v258
    %v275 = vadd.f32 %v175, %v259
    %v276 = vadd.f32 %v176, %v260
    %v277 = vadd.f32 %v177, %v261
    %v278 = vadd.f32 %v178, %v262
    %v279 = vadd.f32 %v179, %v263
    %v280 = vadd.f32 %v180, %v264
    %v281 = vadd.f32 %v181, %v265
    %v282 = vadd.f32 %v182, %v266
    %v283 = vadd.f32 %v183, %v267
    %v284 = vld [vmem:[%s2] sm:$0x1]
    %v286 = vlaneseq
    %v287 = vshrl.u32 %v286, 7
    %v288 = vsub.s32 0, %v287
    %v289 = vrot.slane %v284, %v288
    %v291 = vadd.f32 %v268, %v289
    %v292 = vadd.f32 %v269, %v289
    %v293 = vadd.f32 %v270, %v289
    %v294 = vadd.f32 %v271, %v289
    %v295 = vadd.f32 %v272, %v289
    %v296 = vadd.f32 %v273, %v289
    %v297 = vadd.f32 %v274, %v289
    %v298 = vadd.f32 %v275, %v289
    %v299 = vadd.f32 %v276, %v289
    %v300 = vadd.f32 %v277, %v289
    %v301 = vadd.f32 %v278, %v289
    %v302 = vadd.f32 %v279, %v289
    %v303 = vadd.f32 %v280, %v289
    %v304 = vadd.f32 %v281, %v289
    %v305 = vadd.f32 %v282, %v289
    %v306 = vadd.f32 %v283, %v289
    %v307 = vmax.f32 %v291, 0.0
    %v308 = vmax.f32 %v292, 0.0
    %v309 = vmax.f32 %v293, 0.0
    %v310 = vmax.f32 %v294, 0.0
    %v311 = vmax.f32 %v295, 0.0
    %v312 = vmax.f32 %v296, 0.0
    %v313 = vmax.f32 %v297, 0.0
    %v314 = vmax.f32 %v298, 0.0
    %v315 = vmax.f32 %v299, 0.0
    %v316 = vmax.f32 %v300, 0.0
    %v317 = vmax.f32 %v301, 0.0
    %v318 = vmax.f32 %v302, 0.0
    %v319 = vmax.f32 %v303, 0.0
    %v320 = vmax.f32 %v304, 0.0
    %v321 = vmax.f32 %v305, 0.0
    %v322 = vmax.f32 %v306, 0.0
    %v323 = vpack.c.bf16 %v308, %v307
    %v324 = vpack.c.bf16 %v310, %v309
    %v325 = vpack.c.bf16 %v312, %v311
    %v326 = vpack.c.bf16 %v314, %v313
    %v327 = vpack.c.bf16 %v316, %v315
    %v328 = vpack.c.bf16 %v318, %v317
    %v329 = vpack.c.bf16 %v320, %v319
    %v330 = vpack.c.bf16 %v322, %v321
    %v331 = vld [vmem:[#allocation2] sm:$0xf]
    %v332 = vld [vmem:[#allocation2 + $0x4] sm:$0xf]
    %v333 = vld [vmem:[#allocation2 + $0x8] sm:$0xf]
    %v334 = vld [vmem:[#allocation2 + $0xc] sm:$0xf]
    %v335 = vld [vmem:[#allocation2 + $0x10] sm:$0xf]
    %v336 = vld [vmem:[#allocation2 + $0x14] sm:$0xf]
    %v337 = vld [vmem:[#allocation2 + $0x18] sm:$0xf]
    %v338 = vld [vmem:[#allocation2 + $0x1c] sm:$0xf]
    %v339 = vld [vmem:[#allocation2 + $0x20] sm:$0xf]
    %v340 = vld [vmem:[#allocation2 + $0x24] sm:$0xf]
    %v341 = vld [vmem:[#allocation2 + $0x28] sm:$0xf]
    %v342 = vld [vmem:[#allocation2 + $0x2c] sm:$0xf]
    %v343 = vld [vmem:[#allocation2 + $0x30] sm:$0xf]
    %v344 = vld [vmem:[#allocation2 + $0x34] sm:$0xf]
    %v345 = vld [vmem:[#allocation2 + $0x38] sm:$0xf]
    %v346 = vld [vmem:[#allocation2 + $0x3c] sm:$0xf]
    %v347 = vld [vmem:[%s4] sm:$0x1]
    %v349 = vlaneseq
    %v350 = vshrl.u32 %v349, 7
    %v351 = vsub.s32 0, %v350
    %v352 = vrot.slane %v347, %v351
    %v370 = vunpack.c.l.b16 %v331
    %v371 = vunpack.c.l.b16 %v332
    %v372 = vunpack.c.l.b16 %v333
    %v373 = vunpack.c.l.b16 %v334
    %v374 = vunpack.c.l.b16 %v335
    %v375 = vunpack.c.l.b16 %v336
    %v376 = vunpack.c.l.b16 %v337
    %v377 = vunpack.c.l.b16 %v338
    %v378 = vunpack.c.l.b16 %v339
    %v379 = vunpack.c.l.b16 %v340
    %v380 = vunpack.c.l.b16 %v341
    %v381 = vunpack.c.l.b16 %v342
    %v382 = vunpack.c.l.b16 %v343
    %v383 = vunpack.c.l.b16 %v344
    %v384 = vunpack.c.l.b16 %v345
    %v385 = vunpack.c.l.b16 %v346
    %v386 = vpack.c.b16 %v371, %v370
    %v387 = vpack.c.b16 %v373, %v372
    %v388 = vpack.c.b16 %v375, %v374
    %v389 = vpack.c.b16 %v377, %v376
    %v390 = vpack.c.b16 %v379, %v378
    %v391 = vpack.c.b16 %v381, %v380
    %v392 = vpack.c.b16 %v383, %v382
    %v393 = vpack.c.b16 %v385, %v384
    %402 = vmatprep.subr.bf16.mxu0 0
    %403 = vmatpush1.bf16.msra.mxu0 %v386
    %404 = vmatprep.subr.bf16.mxu0 0
    %405 = vmatpush1.bf16.msra.mxu0 %v387
    %406 = vmatprep.subr.bf16.mxu0 0
    %407 = vmatpush1.bf16.msra.mxu0 %v388
    %408 = vmatprep.subr.bf16.mxu0 0
    %409 = vmatpush1.bf16.msra.mxu0 %v389
    %410 = vmatprep.subr.bf16.mxu0 0
    %411 = vmatpush1.bf16.msra.mxu0 %v390
    %412 = vmatprep.subr.bf16.mxu0 0
    %413 = vmatpush1.bf16.msra.mxu0 %v391
    %414 = vmatprep.subr.bf16.mxu0 0
    %415 = vmatpush1.bf16.msra.mxu0 %v392
    %416 = vmatprep.subr.bf16.mxu0 0
    %417 = vmatpush1.bf16.msra.mxu0 %v393
    %418 = vmatprep.subr.bf16.mxu0 0
    %419 = vmatpush1.bf16.msra.mxu0 0
    %420 = vmatprep.subr.bf16.mxu0 0
    %421 = vmatpush1.bf16.msra.mxu0 0
    %422 = vmatprep.subr.bf16.mxu0 0
    %423 = vmatpush1.bf16.msra.mxu0 0
    %424 = vmatprep.subr.bf16.mxu0 0
    %425 = vmatpush1.bf16.msra.mxu0 0
    %426 = vmatprep.subr.bf16.mxu0 0
    %427 = vmatpush1.bf16.msra.mxu0 0
    %428 = vmatprep.subr.bf16.mxu0 0
    %429 = vmatpush1.bf16.msra.mxu0 0
    %430 = vmatprep.subr.bf16.mxu0 0
    %431 = vmatpush1.bf16.msra.mxu0 0
    %432 = vmatprep.subr.bf16.mxu0 0
    %433 = vmatpush1.bf16.msra.mxu0 0
    %434 = vmatprep.mubr.bf16.mxu0 0
    %435 = vmatmul.mubr.bf16.gmra.mrb[0].mxu0 %v323
    %v436 = vpop.f32.mrb[0].mxu0
    %v437 = vadd.f32 %v352, %v436
    %v438 = vpop.f32.mrb[0].mxu0
    %v439 = vpop.f32.mrb[0].mxu0
    %v440 = vadd.f32 %v352, %v439
    %v441 = vpop.f32.mrb[0].mxu0
    %442 = vmatprep.mubr.bf16.mxu0 0
    %443 = vmatmul.mubr.bf16.gmra.mrb[0].mxu0 %v324
    %v444 = vpop.f32.mrb[0].mxu0
    %v445 = vadd.f32 %v352, %v444
    %v446 = vpop.f32.mrb[0].mxu0
    %v447 = vpop.f32.mrb[0].mxu0
    %v448 = vadd.f32 %v352, %v447
    %v449 = vpop.f32.mrb[0].mxu0
    %450 = vmatprep.mubr.bf16.mxu0 0
    %451 = vmatmul.mubr.bf16.gmra.mrb[0].mxu0 %v325
    %v452 = vpop.f32.mrb[0].mxu0
    %v453 = vadd.f32 %v352, %v452
    %v454 = vpop.f32.mrb[0].mxu0
    %v455 = vpop.f32.mrb[0].mxu0
    %v456 = vadd.f32 %v352, %v455
    %v457 = vpop.f32.mrb[0].mxu0
    %458 = vmatprep.mubr.bf16.mxu0 0
    %459 = vmatmul.mubr.bf16.gmra.mrb[0].mxu0 %v326
    %v460 = vpop.f32.mrb[0].mxu0
    %v461 = vadd.f32 %v352, %v460
    %v462 = vpop.f32.mrb[0].mxu0
    %v463 = vpop.f32.mrb[0].mxu0
    %v464 = vadd.f32 %v352, %v463
    %v465 = vpop.f32.mrb[0].mxu0
    %466 = vmatprep.mubr.bf16.mxu0 0
    %467 = vmatmul.mubr.bf16.gmra.mrb[0].mxu0 %v327
    %v468 = vpop.f32.mrb[0].mxu0
    %v469 = vadd.f32 %v352, %v468
    %v470 = vpop.f32.mrb[0].mxu0
    %v471 = vpop.f32.mrb[0].mxu0
    %v472 = vadd.f32 %v352, %v471
    %v473 = vpop.f32.mrb[0].mxu0
    %474 = vmatprep.mubr.bf16.mxu0 0
    %475 = vmatmul.mubr.bf16.gmra.mrb[0].mxu0 %v328
    %v476 = vpop.f32.mrb[0].mxu0
    %v477 = vadd.f32 %v352, %v476
    %v478 = vpop.f32.mrb[0].mxu0
    %v479 = vpop.f32.mrb[0].mxu0
    %v480 = vadd.f32 %v352, %v479
    %v481 = vpop.f32.mrb[0].mxu0
    %482 = vmatprep.mubr.bf16.mxu0 0
    %483 = vmatmul.mubr.bf16.gmra.mrb[0].mxu0 %v329
    %v484 = vpop.f32.mrb[0].mxu0
    %v485 = vadd.f32 %v352, %v484
    %v486 = vpop.f32.mrb[0].mxu0
    %v487 = vpop.f32.mrb[0].mxu0
    %v488 = vadd.f32 %v352, %v487
    %v489 = vpop.f32.mrb[0].mxu0
    %490 = vmatprep.mubr.bf16.mxu0 0
    %491 = vmatmul.mubr.bf16.gmra.mrb[0].mxu0 %v330
    %v492 = vpop.f32.mrb[0].mxu0
    %v493 = vadd.f32 %v352, %v492
    %v494 = vpop.f32.mrb[0].mxu0
    %v495 = vpop.f32.mrb[0].mxu0
    %v496 = vadd.f32 %v352, %v495
    %v497 = vpop.f32.mrb[0].mxu0
    %498 = vdwg.mxu0
    %v499 = vmax.f32 %v437, 0.0
    %v500 = vmax.f32 %v440, 0.0
    %v501 = vmax.f32 %v445, 0.0
    %v502 = vmax.f32 %v448, 0.0
    %v503 = vmax.f32 %v453, 0.0
    %v504 = vmax.f32 %v456, 0.0
    %v505 = vmax.f32 %v461, 0.0
    %v506 = vmax.f32 %v464, 0.0
    %v507 = vmax.f32 %v469, 0.0
    %v508 = vmax.f32 %v472, 0.0
    %v509 = vmax.f32 %v477, 0.0
    %v510 = vmax.f32 %v480, 0.0
    %v511 = vmax.f32 %v485, 0.0
    %v512 = vmax.f32 %v488, 0.0
    %v513 = vmax.f32 %v493, 0.0
    %v514 = vmax.f32 %v496, 0.0
    %v515 = vpack.c.bf16 %v500, %v499
    %v516 = vpack.c.bf16 %v502, %v501
    %v517 = vpack.c.bf16 %v504, %v503
    %v518 = vpack.c.bf16 %v506, %v505
    %v519 = vpack.c.bf16 %v508, %v507
    %v520 = vpack.c.bf16 %v510, %v509
    %v521 = vpack.c.bf16 %v512, %v511
    %v522 = vpack.c.bf16 %v514, %v513
    %v523 = vld [vmem:[#allocation5] sm:$0xf]
    %v524 = vld [vmem:[#allocation5 + $0x4] sm:$0xf]
    %v525 = vld [vmem:[#allocation5 + $0x8] sm:$0xf]
    %v526 = vld [vmem:[#allocation5 + $0xc] sm:$0xf]
    %v527 = vld [vmem:[#allocation5 + $0x10] sm:$0xf]
    %v528 = vld [vmem:[#allocation5 + $0x14] sm:$0xf]
    %v529 = vld [vmem:[#allocation5 + $0x18] sm:$0xf]
    %v530 = vld [vmem:[#allocation5 + $0x1c] sm:$0xf]
    %v531 = vld [vmem:[#allocation5 + $0x20] sm:$0xf]
    %v532 = vld [vmem:[#allocation5 + $0x24] sm:$0xf]
    %v533 = vld [vmem:[#allocation5 + $0x28] sm:$0xf]
    %v534 = vld [vmem:[#allocation5 + $0x2c] sm:$0xf]
    %v535 = vld [vmem:[#allocation5 + $0x30] sm:$0xf]
    %v536 = vld [vmem:[#allocation5 + $0x34] sm:$0xf]
    %v537 = vld [vmem:[#allocation5 + $0x38] sm:$0xf]
    %v538 = vld [vmem:[#allocation5 + $0x3c] sm:$0xf]
    %v539 = vld [vmem:[%s6] sm:$0x1]
    %v541 = vlaneseq
    %v542 = vshrl.u32 %v541, 7
    %v543 = vsub.s32 0, %v542
    %v544 = vrot.slane %v539, %v543
    %v562 = vunpack.c.l.b16 %v523
    %v563 = vunpack.c.l.b16 %v524
    %v564 = vunpack.c.l.b16 %v525
    %v565 = vunpack.c.l.b16 %v526
    %v566 = vunpack.c.l.b16 %v527
    %v567 = vunpack.c.l.b16 %v528
    %v568 = vunpack.c.l.b16 %v529
    %v569 = vunpack.c.l.b16 %v530
    %v570 = vunpack.c.l.b16 %v531
    %v571 = vunpack.c.l.b16 %v532
    %v572 = vunpack.c.l.b16 %v533
    %v573 = vunpack.c.l.b16 %v534
    %v574 = vunpack.c.l.b16 %v535
    %v575 = vunpack.c.l.b16 %v536
    %v576 = vunpack.c.l.b16 %v537
    %v577 = vunpack.c.l.b16 %v538
    %v578 = vpack.c.b16 %v563, %v562
    %v579 = vpack.c.b16 %v565, %v564
    %v580 = vpack.c.b16 %v567, %v566
    %v581 = vpack.c.b16 %v569, %v568
    %v582 = vpack.c.b16 %v571, %v570
    %v583 = vpack.c.b16 %v573, %v572
    %v584 = vpack.c.b16 %v575, %v574
    %v585 = vpack.c.b16 %v577, %v576
    %594 = vmatprep.subr.bf16.mxu0 0
    %595 = vmatpush1.bf16.msra.mxu0 %v578
    %596 = vmatprep.subr.bf16.mxu0 0
    %597 = vmatpush1.bf16.msra.mxu0 %v579
    %598 = vmatprep.subr.bf16.mxu0 0
    %599 = vmatpush1.bf16.msra.mxu0 %v580
    %600 = vmatprep.subr.bf16.mxu0 0
    %601 = vmatpush1.bf16.msra.mxu0 %v581
    %602 = vmatprep.subr.bf16.mxu0 0
    %603 = vmatpush1.bf16.msra.mxu0 %v582
    %604 = vmatprep.subr.bf16.mxu0 0
    %605 = vmatpush1.bf16.msra.mxu0 %v583
    %606 = vmatprep.subr.bf16.mxu0 0
    %607 = vmatpush1.bf16.msra.mxu0 %v584
    %608 = vmatprep.subr.bf16.mxu0 0
    %609 = vmatpush1.bf16.msra.mxu0 %v585
    %610 = vmatprep.subr.bf16.mxu0 0
    %611 = vmatpush1.bf16.msra.mxu0 0
    %612 = vmatprep.subr.bf16.mxu0 0
    %613 = vmatpush1.bf16.msra.mxu0 0
    %614 = vmatprep.subr.bf16.mxu0 0
    %615 = vmatpush1.bf16.msra.mxu0 0
    %616 = vmatprep.subr.bf16.mxu0 0
    %617 = vmatpush1.bf16.msra.mxu0 0
    %618 = vmatprep.subr.bf16.mxu0 0
    %619 = vmatpush1.bf16.msra.mxu0 0
    %620 = vmatprep.subr.bf16.mxu0 0
    %621 = vmatpush1.bf16.msra.mxu0 0
    %622 = vmatprep.subr.bf16.mxu0 0
    %623 = vmatpush1.bf16.msra.mxu0 0
    %624 = vmatprep.subr.bf16.mxu0 0
    %625 = vmatpush1.bf16.msra.mxu0 0
    %626 = vmatprep.mubr.bf16.mxu0 0
    %627 = vmatmul.mubr.bf16.gmra.mrb[0].mxu0 %v515
    %v628 = vpop.f32.mrb[0].mxu0
    %v629 = vadd.f32 %v544, %v628
    %v630 = vpop.f32.mrb[0].mxu0
    %v631 = vpop.f32.mrb[0].mxu0
    %v632 = vadd.f32 %v544, %v631
    %v633 = vpop.f32.mrb[0].mxu0
    %634 = vmatprep.mubr.bf16.mxu0 0
    %635 = vmatmul.mubr.bf16.gmra.mrb[0].mxu0 %v516
    %v636 = vpop.f32.mrb[0].mxu0
    %v637 = vadd.f32 %v544, %v636
    %v638 = vpop.f32.mrb[0].mxu0
    %v639 = vpop.f32.mrb[0].mxu0
    %v640 = vadd.f32 %v544, %v639
    %v641 = vpop.f32.mrb[0].mxu0
    %642 = vmatprep.mubr.bf16.mxu0 0
    %643 = vmatmul.mubr.bf16.gmra.mrb[0].mxu0 %v517
    %v644 = vpop.f32.mrb[0].mxu0
    %v645 = vadd.f32 %v544, %v644
    %v646 = vpop.f32.mrb[0].mxu0
    %v647 = vpop.f32.mrb[0].mxu0
    %v648 = vadd.f32 %v544, %v647
    %v649 = vpop.f32.mrb[0].mxu0
    %650 = vmatprep.mubr.bf16.mxu0 0
    %651 = vmatmul.mubr.bf16.gmra.mrb[0].mxu0 %v518
    %v652 = vpop.f32.mrb[0].mxu0
    %v653 = vadd.f32 %v544, %v652
    %v654 = vpop.f32.mrb[0].mxu0
    %v655 = vpop.f32.mrb[0].mxu0
    %v656 = vadd.f32 %v544, %v655
    %v657 = vpop.f32.mrb[0].mxu0
    %658 = vmatprep.mubr.bf16.mxu0 0
    %659 = vmatmul.mubr.bf16.gmra.mrb[0].mxu0 %v519
    %v660 = vpop.f32.mrb[0].mxu0
    %v661 = vadd.f32 %v544, %v660
    %v662 = vpop.f32.mrb[0].mxu0
    %v663 = vpop.f32.mrb[0].mxu0
    %v664 = vadd.f32 %v544, %v663
    %v665 = vpop.f32.mrb[0].mxu0
    %666 = vmatprep.mubr.bf16.mxu0 0
    %667 = vmatmul.mubr.bf16.gmra.mrb[0].mxu0 %v520
    %v668 = vpop.f32.mrb[0].mxu0
    %v669 = vadd.f32 %v544, %v668
    %v670 = vpop.f32.mrb[0].mxu0
    %v671 = vpop.f32.mrb[0].mxu0
    %v672 = vadd.f32 %v544, %v671
    %v673 = vpop.f32.mrb[0].mxu0
    %674 = vmatprep.mubr.bf16.mxu0 0
    %675 = vmatmul.mubr.bf16.gmra.mrb[0].mxu0 %v521
    %v676 = vpop.f32.mrb[0].mxu0
    %v677 = vadd.f32 %v544, %v676
    %v678 = vpop.f32.mrb[0].mxu0
    %v679 = vpop.f32.mrb[0].mxu0
    %v680 = vadd.f32 %v544, %v679
    %v681 = vpop.f32.mrb[0].mxu0
    %682 = vmatprep.mubr.bf16.mxu0 0
    %683 = vmatmul.mubr.bf16.gmra.mrb[0].mxu0 %v522
    %v684 = vpop.f32.mrb[0].mxu0
    %v685 = vadd.f32 %v544, %v684
    %v686 = vpop.f32.mrb[0].mxu0
    %v687 = vpop.f32.mrb[0].mxu0
    %v688 = vadd.f32 %v544, %v687
    %v689 = vpop.f32.mrb[0].mxu0
    %690 = vdwg.mxu0
    %v691 = vmax.f32 %v629, 0.0
    %v692 = vmax.f32 %v632, 0.0
    %v693 = vmax.f32 %v637, 0.0
    %v694 = vmax.f32 %v640, 0.0
    %v695 = vmax.f32 %v645, 0.0
    %v696 = vmax.f32 %v648, 0.0
    %v697 = vmax.f32 %v653, 0.0
    %v698 = vmax.f32 %v656, 0.0
    %v699 = vmax.f32 %v661, 0.0
    %v700 = vmax.f32 %v664, 0.0
    %v701 = vmax.f32 %v669, 0.0
    %v702 = vmax.f32 %v672, 0.0
    %v703 = vmax.f32 %v677, 0.0
    %v704 = vmax.f32 %v680, 0.0
    %v705 = vmax.f32 %v685, 0.0
    %v706 = vmax.f32 %v688, 0.0
    %v707 = vld [vmem:[#allocation7] sm:$0xff]
    %v708 = vadd.f32 %v691, %v692
    %v709 = vrot.slane %v708, 4
    %v710 = vadd.f32 %v708, %v709
    %v711 = vrot.slane %v710, 2
    %v712 = vadd.f32 %v710, %v711
    %v713 = vrot.slane %v712, 1
    %v714 = vadd.f32 %v712, %v713
    %v715 = vadd.f32 %v693, %v694
    %v716 = vrot.slane %v715, 4
    %v717 = vadd.f32 %v715, %v716
    %v718 = vrot.slane %v717, 2
    %v719 = vadd.f32 %v717, %v718
    %v720 = vrot.slane %v719, 1
    %v721 = vadd.f32 %v719, %v720
    %v722 = vadd.f32 %v695, %v696
    %v723 = vrot.slane %v722, 4
    %v724 = vadd.f32 %v722, %v723
    %v725 = vrot.slane %v724, 2
    %v726 = vadd.f32 %v724, %v725
    %v727 = vrot.slane %v726, 1
    %v728 = vadd.f32 %v726, %v727
    %v729 = vadd.f32 %v697, %v698
    %v730 = vrot.slane %v729, 4
    %v731 = vadd.f32 %v729, %v730
    %v732 = vrot.slane %v731, 2
    %v733 = vadd.f32 %v731, %v732
    %v734 = vrot.slane %v733, 1
    %v735 = vadd.f32 %v733, %v734
    %v736 = vadd.f32 %v699, %v700
    %v737 = vrot.slane %v736, 4
    %v738 = vadd.f32 %v736, %v737
    %v739 = vrot.slane %v738, 2
    %v740 = vadd.f32 %v738, %v739
    %v741 = vrot.slane %v740, 1
    %v742 = vadd.f32 %v740, %v741
    %v743 = vadd.f32 %v701, %v702
    %v744 = vrot.slane %v743, 4
    %v745 = vadd.f32 %v743, %v744
    %v746 = vrot.slane %v745, 2
    %v747 = vadd.f32 %v745, %v746
    %v748 = vrot.slane %v747, 1
    %v749 = vadd.f32 %v747, %v748
    %v750 = vadd.f32 %v703, %v704
    %v751 = vrot.slane %v750, 4
    %v752 = vadd.f32 %v750, %v751
    %v753 = vrot.slane %v752, 2
    %v754 = vadd.f32 %v752, %v753
    %v755 = vrot.slane %v754, 1
    %v756 = vadd.f32 %v754, %v755
    %v757 = vadd.f32 %v705, %v706
    %v758 = vrot.slane %v757, 4
    %v759 = vadd.f32 %v757, %v758
    %v760 = vrot.slane %v759, 2
    %v761 = vadd.f32 %v759, %v760
    %v762 = vrot.slane %v761, 1
    %v763 = vadd.f32 %v761, %v762
    %vm772 = vcmask 1041409
    %v773 = vsel %vm772, %v721, %v714
    %vm774 = vcmask 1042434
    %v775 = vsel %vm774, %v728, %v773
    %vm776 = vcmask 1043459
    %v777 = vsel %vm776, %v735, %v775
    %vm778 = vcmask 1044484
    %v779 = vsel %vm778, %v742, %v777
    %vm780 = vcmask 1045509
    %v781 = vsel %vm780, %v749, %v779
    %vm782 = vcmask 1046534
    %v783 = vsel %vm782, %v756, %v781
    %vm784 = vcmask 1047559
    %v785 = vsel %vm784, %v763, %v783
    %v787 = vadd.f32 %v707, %v785
    %788 = vst [vmem:[#allocation7] sm:$0xff] %v787
    // Predicated region
    $region50: #{tpu_custom_call.1} parent=1 // pred_check
      %p789 = pneg %p62
    $region51: #{tpu_custom_call.1} parent=1 // pred_check_branch
      %791 = sbr.rel (%p789) target = $region53
    $region52: #{tpu_custom_call.1} parent=1 // pred_region
      %v792 = vld [vmem:[#allocation7] sm:$0xff]
      %v793 = vmul.f32 %v792, 0.0625
      %v794 = vld [vmem:[%s7] sm:$0xff]
      %v795 = vld [vmem:[%s7 + $0x8] sm:$0xff]
      %v796 = vld [vmem:[%s7 + $0x10] sm:$0xff]
      %v797 = vld [vmem:[%s7 + $0x18] sm:$0xff]
      %v798 = vld [vmem:[%s7 + $0x20] sm:$0xff]
      %v799 = vld [vmem:[%s7 + $0x28] sm:$0xff]
      %v800 = vld [vmem:[%s7 + $0x30] sm:$0xff]
      %v801 = vld [vmem:[%s7 + $0x38] sm:$0xff]
      %v802 = vld [vmem:[%s7 + $0x40] sm:$0xff]
      %v803 = vld [vmem:[%s7 + $0x48] sm:$0xff]
      %v804 = vld [vmem:[%s7 + $0x50] sm:$0xff]
      %v805 = vld [vmem:[%s7 + $0x58] sm:$0xff]
      %v806 = vld [vmem:[%s7 + $0x60] sm:$0xff]
      %v807 = vld [vmem:[%s7 + $0x68] sm:$0xff]
      %v808 = vld [vmem:[%s7 + $0x70] sm:$0xff]
      %v809 = vld [vmem:[%s7 + $0x78] sm:$0xff]
      %v810 = vld [vmem:[%s8] sm:$0x1]
      %v812 = vlaneseq
      %v813 = vshrl.u32 %v812, 7
      %v814 = vsub.s32 0, %v813
      %v815 = vrot.slane %v810, %v814
      %817 = vmatprep.subr.mxu0 0.0
      %818 = vmatpush1.msra.mxu0 %v794
      %819 = vmatprep.subr.mxu0 0.0
      %820 = vmatpush1.msra.mxu0 %v795
      %821 = vmatprep.subr.mxu0 0.0
      %822 = vmatpush1.msra.mxu0 %v796
      %823 = vmatprep.subr.mxu0 0.0
      %824 = vmatpush1.msra.mxu0 %v797
      %825 = vmatprep.subr.mxu0 0.0
      %826 = vmatpush1.msra.mxu0 %v798
      %827 = vmatprep.subr.mxu0 0.0
      %828 = vmatpush1.msra.mxu0 %v799
      %829 = vmatprep.subr.mxu0 0.0
      %830 = vmatpush1.msra.mxu0 %v800
      %831 = vmatprep.subr.mxu0 0.0
      %832 = vmatpush1.msra.mxu0 %v801
      %833 = vmatprep.subr.mxu0 0.0
      %834 = vmatpush1.msra.mxu0 %v802
      %835 = vmatprep.subr.mxu0 0.0
      %836 = vmatpush1.msra.mxu0 %v803
      %837 = vmatprep.subr.mxu0 0.0
      %838 = vmatpush1.msra.mxu0 %v804
      %839 = vmatprep.subr.mxu0 0.0
      %840 = vmatpush1.msra.mxu0 %v805
      %841 = vmatprep.subr.mxu0 0.0
      %842 = vmatpush1.msra.mxu0 %v806
      %843 = vmatprep.subr.mxu0 0.0
      %844 = vmatpush1.msra.mxu0 %v807
      %845 = vmatprep.subr.mxu0 0.0
      %846 = vmatpush1.msra.mxu0 %v808
      %847 = vmatprep.subr.mxu0 0.0
      %848 = vmatpush1.msra.mxu0 %v809
      %849 = vmatprep.subr.mxu0 0.0
      %850 = vmatpush1.msra.mxu0 0.0
      %851 = vmatprep.subr.mxu0 0.0
      %852 = vmatpush1.msra.mxu0 0.0
      %853 = vmatprep.subr.mxu0 0.0
      %854 = vmatpush1.msra.mxu0 0.0
      %855 = vmatprep.subr.mxu0 0.0
      %856 = vmatpush1.msra.mxu0 0.0
      %857 = vmatprep.subr.mxu0 0.0
      %858 = vmatpush1.msra.mxu0 0.0
      %859 = vmatprep.subr.mxu0 0.0
      %860 = vmatpush1.msra.mxu0 0.0
      %861 = vmatprep.subr.mxu0 0.0
      %862 = vmatpush1.msra.mxu0 0.0
      %863 = vmatprep.subr.mxu0 0.0
      %864 = vmatpush1.msra.mxu0 0.0
      %865 = vmatprep.subr.mxu0 0.0
      %866 = vmatpush1.msra.mxu0 0.0
      %867 = vmatprep.subr.mxu0 0.0
      %868 = vmatpush1.msra.mxu0 0.0
      %869 = vmatprep.subr.mxu0 0.0
      %870 = vmatpush1.msra.mxu0 0.0
      %871 = vmatprep.subr.mxu0 0.0
      %872 = vmatpush1.msra.mxu0 0.0
      %873 = vmatprep.subr.mxu0 0.0
      %874 = vmatpush1.msra.mxu0 0.0
      %875 = vmatprep.subr.mxu0 0.0
      %876 = vmatpush1.msra.mxu0 0.0
      %877 = vmatprep.subr.mxu0 0.0
      %878 = vmatpush1.msra.mxu0 0.0
      %879 = vmatprep.subr.mxu0 0.0
      %880 = vmatpush1.msra.mxu0 0.0
      %881 = vmatprep.mubr.f32.mxu0 0.0
      %882 = vmatmul.mubr.f32.gmra.mrb[0].mxu0 %v793
      %v883 = vpop.f32.mrb[0].mxu0
      %v884 = vadd.f32 %v815, %v883
      %v885 = vpop.f32.mrb[0].mxu0
      %886 = vdwg.mxu0
      %887 = vst [vmem:[#allocation7] sm:$0xff] %v884
    $region53: #{tpu_custom_call.1} parent=1 // pred_fallthru
      _
    // Predicated region
    $region54: #{tpu_custom_call.1} parent=1 // pred_check
      _
    $region55: #{tpu_custom_call.1} parent=1 // pred_check_branch
      %889 = sbr.rel (0) target = $region57
    $region56: #{tpu_custom_call.1} parent=1 // pred_region
      %s891 = ssub.s32 128, 128
      %892 = vsyncadd [#allocation4], %s891
      %s894 = sshll.u32 [#allocation7], 4
      %s895 = int_to_ptr.vmem [resolvable:$true] %s894
      %897 = dma.vmem_to_hbm [thread:$0]  %s895, 128, %s9, [#allocation4]
    $region57: #{tpu_custom_call.1} parent=1 // pred_fallthru
      _
    // Predicated region
    $region58: #{tpu_custom_call.1} parent=1 // pred_check
      _
    $region59: #{tpu_custom_call.1} parent=1 // pred_check_branch
      %899 = sbr.rel (0) target = $region61
    $region60: #{tpu_custom_call.1} parent=1 // pred_region
      %900 = dma.done [#allocation4], 128
    $region61: #{tpu_custom_call.1} parent=1 // pred_fallthru
      _
    %901 = vsyncpa [#allocation3], 1
    %902 = vsyncpa [#allocation6], 1
    %903 = vsyncpa [#allocation4], 1

</llo_original>
